<compile_context>
chip_gen: v6e
topology: v6e:2x2x1
jax: 0.10.0
libtpu: 0.0.40
codegen_flags: <defaults>
</compile_context>

<pallas_src>
import functools

import jax
import jax.numpy as jnp
from jax.experimental import pallas as pl
from jax.experimental.pallas import tpu as pltpu

D_IN = 384
D_H = 50

SMALL_BATCH_THRESHOLD = 512  # below this, grid overhead dominates -> no-grid path
DEFAULT_TM = 512             # >=512 rows reaches ~85% of HBM roofline; safe in VMEM
                             # on all of v5e/v6e/v7x (~3 MiB double-buffered inputs)


def network_kernel(x1_ref, x2_ref,
                   w1_ref, b1_ref,
                   w2_ref, b2_ref,
                   w3a_ref, w3b_ref, b3_ref,
                   o_ref):
    tm = x1_ref.shape[0]
    w1 = w1_ref[...]
    w2 = w2_ref[...]

    # Fused branches: stack the two input tiles along sublanes so feedforward1
    # and feedforward2 each run as a single MXU dot for both branches.
    x = jnp.concatenate([x1_ref[...], x2_ref[...]], axis=0)          # [2*TM, 384]

    h = jnp.dot(x, w1, preferred_element_type=jnp.float32) + b1_ref[...]
    h = jnp.maximum(h, 0.0)
    # Dropout(p=0.2) is the identity in eval mode.
    # TODO(synk): training-mode dropout (pltpu.prng_* Bernoulli mask + 1/(1-p) scale) not emitted.
    h = jnp.dot(h.astype(w2.dtype), w2, preferred_element_type=jnp.float32) + b2_ref[...]
    h = jnp.maximum(h, 0.0)                                           # [2*TM, 50], f32

    h1 = h[:tm, :]
    h2 = h[tm:, :]

    # concat(h1, h2) @ W3 + b3 == sum(h1*W3[:50].T + h2*W3[50:].T, lanes) + b3.
    # N=1 matmul wastes the MXU; do it on the VPU (mul) + XLU (lane reduce).
    out = (jnp.sum(h1 * w3a_ref[...] + h2 * w3b_ref[...], axis=-1, keepdims=True)
           + b3_ref[...])
    o_ref[...] = jnp.maximum(out, 0.0)


@functools.partial(jax.jit, static_argnames=("tm", "compute_dtype"))
def network_forward(x1, x2, params, *, tm=DEFAULT_TM, compute_dtype=jnp.float32):
    B, d = x1.shape
    assert d == D_IN and x2.shape == (B, D_IN)

    # Inputs and matmul weights in compute_dtype (bf16 halves HBM input bytes);
    # biases / final-layer row weights stay f32 so elementwise math is f32.
    x1c = x1.astype(compute_dtype)
    x2c = x2.astype(compute_dtype)
    w1 = params["w1"].astype(compute_dtype)
    w2 = params["w2"].astype(compute_dtype)
    b1 = params["b1"].astype(jnp.float32)
    b2 = params["b2"].astype(jnp.float32)
    w3a = params["w3a"].astype(jnp.float32)
    w3b = params["w3b"].astype(jnp.float32)
    b3 = params["b3"].astype(jnp.float32)

    weight_args = (w1, b1, w2, b2, w3a, w3b, b3)

    if B <= SMALL_BATCH_THRESHOLD:
        # Small-batch fast path: one whole-array block, no grid-step overhead.
        vmem = pl.BlockSpec(memory_space=pltpu.MemorySpace.VMEM)
        return pl.pallas_call(
            network_kernel,
            out_shape=jax.ShapeDtypeStruct((B, 1), jnp.float32),
            in_specs=[vmem] * 9,
            out_specs=vmem,
        )(x1c, x2c, *weight_args)

    # Gridded, double-buffered batch pipeline. Pad ragged batches to TM.
    n_tiles = pl.cdiv(B, tm)
    b_pad = n_tiles * tm
    if b_pad != B:
        pad = b_pad - B
        x1c = jnp.pad(x1c, ((0, pad), (0, 0)))
        x2c = jnp.pad(x2c, ((0, pad), (0, 0)))

    x_spec = pl.BlockSpec((tm, D_IN), lambda i: (i, 0))

    def resident(shape):
        # Constant block index -> fetched once, VMEM-resident across all tiles.
        return pl.BlockSpec(shape, lambda i: (0, 0))

    out = pl.pallas_call(
        network_kernel,
        out_shape=jax.ShapeDtypeStruct((b_pad, 1), jnp.float32),
        grid=(n_tiles,),
        in_specs=[
            x_spec, x_spec,
            resident((D_IN, D_H)), resident((1, D_H)),   # W1, b1
            resident((D_H, D_H)), resident((1, D_H)),    # W2, b2
            resident((1, D_H)), resident((1, D_H)),      # W3 halves (rows)
            resident((1, 1)),                            # b3
        ],
        out_specs=pl.BlockSpec((tm, 1), lambda i: (i, 0)),
        compiler_params=pltpu.CompilerParams(
            dimension_semantics=("parallel",),  # megacore split on v7x
        ),
    )(x1c, x2c, *weight_args)
    return out[:B]


def init_params(key):
    """Deterministic init mimicking PyTorch Linear default U(-1/sqrt(fan_in), +1/sqrt(fan_in))."""
    ks = jax.random.split(key, 6)

    def lin(kw, kb, fan_in, fan_out):
        bound = 1.0 / jnp.sqrt(float(fan_in))
        w = jax.random.uniform(kw, (fan_in, fan_out), jnp.float32, -bound, bound)
        b = jax.random.uniform(kb, (1, fan_out), jnp.float32, -bound, bound)
        return w, b

    w1, b1 = lin(ks[0], ks[1], D_IN, D_H)      # feedforward1: 384 -> 50
    w2, b2 = lin(ks[2], ks[3], D_H, D_H)       # feedforward2: 50 -> 50
    w3, b3 = lin(ks[4], ks[5], 2 * D_H, 1)     # feedforward3: 100 -> 1
    return {
        "w1": w1, "b1": b1,
        "w2": w2, "b2": b2,
        # W3 stored as two [1, 50] rows for the VPU multiply-reduce final layer.
        "w3a": w3[:D_H, :].T, "w3b": w3[D_H:, :].T, "b3": b3,
    }


def network_reference(x1, x2, params, compute_dtype=jnp.float32):
    """Plain-JAX reference (eval-mode dropout), mirroring the kernel's dtype plan."""
    w1 = params["w1"].astype(compute_dtype)
    w2 = params["w2"].astype(compute_dtype)

    def branch(x):
        h = jnp.dot(x.astype(compute_dtype), w1,
                    preferred_element_type=jnp.float32) + params["b1"]
        h = jnp.maximum(h, 0.0)
        h = jnp.dot(h.astype(compute_dtype), w2,
                    preferred_element_type=jnp.float32) + params["b2"]
        return jnp.maximum(h, 0.0)

    h1, h2 = branch(x1), branch(x2)
    out = (jnp.sum(h1 * params["w3a"] + h2 * params["w3b"], axis=-1, keepdims=True)
           + params["b3"])
    return jnp.maximum(out, 0.0)


if __name__ == "__main__":
    key = jax.random.PRNGKey(0)
    k_p, k1, k2, k3, k4 = jax.random.split(key, 5)
    params = init_params(k_p)

    # 1) Small-batch fast path (no grid).
    B_small = 8
    x1s = jax.random.normal(k1, (B_small, D_IN), jnp.float32)
    x2s = jax.random.normal(k2, (B_small, D_IN), jnp.float32)
    out_s = jax.block_until_ready(network_forward(x1s, x2s, params))
    ref_s = network_reference(x1s, x2s, params)
    assert out_s.shape == (B_small, 1), out_s.shape
    assert jnp.allclose(out_s, ref_s, atol=1e-5, rtol=1e-5)

    # 2) Gridded path with a ragged last tile (B not a multiple of TM).
    B_big = 1200
    x1b = jax.random.normal(k3, (B_big, D_IN), jnp.float32)
    x2b = jax.random.normal(k4, (B_big, D_IN), jnp.float32)
    out_b = jax.block_until_ready(network_forward(x1b, x2b, params, tm=512))
    ref_b = network_reference(x1b, x2b, params)
    assert out_b.shape == (B_big, 1), out_b.shape
    assert jnp.allclose(out_b, ref_b, atol=1e-5, rtol=1e-5)

    # 3) bf16-input gridded path (HBM-bandwidth optimization for v6e/v7x).
    out_bf = jax.block_until_ready(
        network_forward(x1b, x2b, params, tm=512, compute_dtype=jnp.bfloat16))
    ref_bf = network_reference(x1b, x2b, params, compute_dtype=jnp.bfloat16)
    assert out_bf.shape == (B_big, 1), out_bf.shape
    assert jnp.allclose(out_bf, ref_bf, atol=2e-2, rtol=2e-2)

    print("KERNEL_OK")
</pallas_src>

<mosaic_0001>
module attributes {stable_mosaic.version = 11 : i64} {
  func.func @network_kernel(%arg0: memref<8x384xf32, #tpu.memory_space<vmem>>, %arg1: memref<8x384xf32, #tpu.memory_space<vmem>>, %arg2: memref<384x50xf32, #tpu.memory_space<vmem>>, %arg3: memref<1x50xf32, #tpu.memory_space<vmem>>, %arg4: memref<50x50xf32, #tpu.memory_space<vmem>>, %arg5: memref<1x50xf32, #tpu.memory_space<vmem>>, %arg6: memref<1x50xf32, #tpu.memory_space<vmem>>, %arg7: memref<1x50xf32, #tpu.memory_space<vmem>>, %arg8: memref<1x1xf32, #tpu.memory_space<vmem>>, %arg9: memref<8x1xf32, #tpu.memory_space<vmem>>) attributes {dimension_semantics = [], scalar_prefetch = 0 : i64, scratch_operands = 0 : i64, tpu.core_type = #tpu.core_type<tc>} {
    %c0 = arith.constant 0 : index
    %c0_0 = arith.constant 0 : index
    %0 = vector.load %arg2[%c0, %c0_0] : memref<384x50xf32, #tpu.memory_space<vmem>>, vector<384x50xf32>
    %c0_1 = arith.constant 0 : index
    %c0_2 = arith.constant 0 : index
    %1 = vector.load %arg4[%c0_1, %c0_2] : memref<50x50xf32, #tpu.memory_space<vmem>>, vector<50x50xf32>
    %c0_3 = arith.constant 0 : index
    %c0_4 = arith.constant 0 : index
    %2 = vector.load %arg0[%c0_3, %c0_4] : memref<8x384xf32, #tpu.memory_space<vmem>>, vector<8x384xf32>
    %c0_5 = arith.constant 0 : index
    %c0_6 = arith.constant 0 : index
    %3 = vector.load %arg1[%c0_5, %c0_6] : memref<8x384xf32, #tpu.memory_space<vmem>>, vector<8x384xf32>
    %4 = tpu.concatenate %2, %3 in 0 : vector<8x384xf32>, vector<8x384xf32> -> vector<16x384xf32>
    %cst = arith.constant dense<0.000000e+00> : vector<16x50xf32>
    %5 = tpu.matmul %4, %0, %cst {dimension_numbers = #tpu.dot_dimension_numbers<[1], [0], [0], [1], [0, 0, 1, 1], [], []>} : vector<16x384xf32>, vector<384x50xf32>, vector<16x50xf32> -> vector<16x50xf32>
    %c0_7 = arith.constant 0 : index
    %c0_8 = arith.constant 0 : index
    %6 = vector.load %arg3[%c0_7, %c0_8] : memref<1x50xf32, #tpu.memory_space<vmem>>, vector<1x50xf32>
    %7 = vector.broadcast %6 : vector<1x50xf32> to vector<16x50xf32>
    %8 = arith.addf %5, %7 : vector<16x50xf32>
    %cst_9 = arith.constant 0.000000e+00 : f32
    %9 = vector.broadcast %cst_9 : f32 to vector<16x50xf32>
    %10 = arith.maximumf %8, %9 : vector<16x50xf32>
    %cst_10 = arith.constant dense<0.000000e+00> : vector<16x50xf32>
    %11 = tpu.matmul %10, %1, %cst_10 {dimension_numbers = #tpu.dot_dimension_numbers<[1], [0], [0], [1], [0, 0, 1, 1], [], []>} : vector<16x50xf32>, vector<50x50xf32>, vector<16x50xf32> -> vector<16x50xf32>
    %c0_11 = arith.constant 0 : index
    %c0_12 = arith.constant 0 : index
    %12 = vector.load %arg5[%c0_11, %c0_12] : memref<1x50xf32, #tpu.memory_space<vmem>>, vector<1x50xf32>
    %13 = vector.broadcast %12 : vector<1x50xf32> to vector<16x50xf32>
    %14 = arith.addf %11, %13 : vector<16x50xf32>
    %cst_13 = arith.constant 0.000000e+00 : f32
    %15 = vector.broadcast %cst_13 : f32 to vector<16x50xf32>
    %16 = arith.maximumf %14, %15 : vector<16x50xf32>
    %17 = vector.extract_strided_slice %16 {offsets = [0, 0], sizes = [8, 50], strides = [1, 1]} : vector<16x50xf32> to vector<8x50xf32>
    %18 = vector.extract_strided_slice %16 {offsets = [8, 0], sizes = [8, 50], strides = [1, 1]} : vector<16x50xf32> to vector<8x50xf32>
    %c0_14 = arith.constant 0 : index
    %c0_15 = arith.constant 0 : index
    %19 = vector.load %arg6[%c0_14, %c0_15] : memref<1x50xf32, #tpu.memory_space<vmem>>, vector<1x50xf32>
    %20 = vector.broadcast %19 : vector<1x50xf32> to vector<8x50xf32>
    %21 = arith.mulf %17, %20 : vector<8x50xf32>
    %c0_16 = arith.constant 0 : index
    %c0_17 = arith.constant 0 : index
    %22 = vector.load %arg7[%c0_16, %c0_17] : memref<1x50xf32, #tpu.memory_space<vmem>>, vector<1x50xf32>
    %23 = vector.broadcast %22 : vector<1x50xf32> to vector<8x50xf32>
    %24 = arith.mulf %18, %23 : vector<8x50xf32>
    %25 = arith.addf %21, %24 : vector<8x50xf32>
    %cst_18 = arith.constant dense<0.000000e+00> : vector<8xf32>
    %26 = vector.multi_reduction <add>, %25, %cst_18 [1] : vector<8x50xf32> to vector<8xf32>
    %27 = vector.shape_cast %26 : vector<8xf32> to vector<8x1xf32>
    %c0_19 = arith.constant 0 : index
    %c0_20 = arith.constant 0 : index
    %28 = vector.load %arg8[%c0_19, %c0_20] : memref<1x1xf32, #tpu.memory_space<vmem>>, vector<1x1xf32>
    %29 = vector.broadcast %28 : vector<1x1xf32> to vector<8x1xf32>
    %30 = arith.addf %27, %29 : vector<8x1xf32>
    %cst_21 = arith.constant 0.000000e+00 : f32
    %31 = vector.broadcast %cst_21 : f32 to vector<8x1xf32>
    %32 = arith.maximumf %30, %31 : vector<8x1xf32>
    %c0_22 = arith.constant 0 : index
    %c0_23 = arith.constant 0 : index
    %33 = vector.load %arg9[%c0_22, %c0_23] : memref<8x1xf32, #tpu.memory_space<vmem>>, vector<8x1xf32>
    tpu.vector_store %arg9[%c0_22, %c0_23], %32 {strides = array<i32>} : memref<8x1xf32, #tpu.memory_space<vmem>>, vector<8x1xf32>,
    return
  }
}

</mosaic_0001>

<llo_original>
// kernel: network_forward.1
$region0: #{network_forward.1}
  #allocation0 [shape = 'u32[]', space=smem, size = 0x4, offset = 0x4, fixed_abs, tag = 'smem constant byte address 0x4 - core index']
  #allocation1 [shape = 'u32[144,128]{1,0:T(1,128)}', space=vmem, size = 0x12000, scoped, tag = 'internal scratch']
  #allocation2 [shape = 'f32[1,1]{1,0:T(1,128)S(1)}', space=vmem, size = 0x200, scoped, tag = 'scoped memory for network_forward.1']
  %s0 = inlined_call_operand.vmem [shape: f32[8,384], index: 0, kind: input, shape index: {}]
  %s1 = inlined_call_operand.vmem [shape: f32[8,384], index: 1, kind: input, shape index: {}]
  %s2 = inlined_call_operand.vmem [shape: f32[384,50], index: 2, kind: input, shape index: {}]
  %s3 = inlined_call_operand.vmem [shape: f32[1,50], index: 3, kind: input, shape index: {}]
  %s4 = inlined_call_operand.vmem [shape: f32[50,50], index: 4, kind: input, shape index: {}]
  %s5 = inlined_call_operand.vmem [shape: f32[1,50], index: 5, kind: input, shape index: {}]
  %s6 = inlined_call_operand.vmem [shape: f32[1,50], index: 6, kind: input, shape index: {}]
  %s7 = inlined_call_operand.vmem [shape: f32[1,50], index: 7, kind: input, shape index: {}]
  %s8 = inlined_call_operand.<no memory space> [shape: f32[1,1], index: 8, kind: input, shape index: {}]
  %s9 = inlined_call_operand.vmem [shape: f32[8,1], index: 9, kind: output, shape index: {}]
  %s10 = sld [smem:[#allocation0]]
  $region46: #{network_forward.1} parent=0
    _
  %s12 = ssub.s32 1, %s10
  %s13 = scalar_select 0, %s12, %s10
  %v14 = vstv %s8
  %15 = vst [vmem:[#allocation2] sm:$0x1] %v14
  // Predicated region
  $region2: #{network_forward.1} parent=0 // pred_check
    _
  $region3: #{network_forward.1} parent=0 // pred_check_branch
    %17 = sbr.rel (0) target = $region5
  $region4: #{network_forward.1} parent=0 // pred_region
    _
  $region5: #{network_forward.1} parent=0 // pred_fallthru
    _
  // Predicated region
  $region6: #{network_forward.1} parent=0 // pred_check
    _
  $region7: #{network_forward.1} parent=0 // pred_check_branch
    %19 = sbr.rel (0) target = $region9
  $region8: #{network_forward.1} parent=0 // pred_region
    _
  $region9: #{network_forward.1} parent=0 // pred_fallthru
    _
  // Predicated region
  $region10: #{network_forward.1} parent=0 // pred_check
    _
  $region11: #{network_forward.1} parent=0 // pred_check_branch
    %21 = sbr.rel (0) target = $region13
  $region12: #{network_forward.1} parent=0 // pred_region
    _
  $region13: #{network_forward.1} parent=0 // pred_fallthru
    _
  // Predicated region
  $region14: #{network_forward.1} parent=0 // pred_check
    _
  $region15: #{network_forward.1} parent=0 // pred_check_branch
    %23 = sbr.rel (0) target = $region17
  $region16: #{network_forward.1} parent=0 // pred_region
    _
  $region17: #{network_forward.1} parent=0 // pred_fallthru
    _
  // Predicated region
  $region18: #{network_forward.1} parent=0 // pred_check
    _
  $region19: #{network_forward.1} parent=0 // pred_check_branch
    %25 = sbr.rel (0) target = $region21
  $region20: #{network_forward.1} parent=0 // pred_region
    _
  $region21: #{network_forward.1} parent=0 // pred_fallthru
    _
  // Predicated region
  $region22: #{network_forward.1} parent=0 // pred_check
    _
  $region23: #{network_forward.1} parent=0 // pred_check_branch
    %27 = sbr.rel (0) target = $region25
  $region24: #{network_forward.1} parent=0 // pred_region
    _
  $region25: #{network_forward.1} parent=0 // pred_fallthru
    _
  // Predicated region
  $region26: #{network_forward.1} parent=0 // pred_check
    _
  $region27: #{network_forward.1} parent=0 // pred_check_branch
    %29 = sbr.rel (0) target = $region29
  $region28: #{network_forward.1} parent=0 // pred_region
    _
  $region29: #{network_forward.1} parent=0 // pred_fallthru
    _
  // Predicated region
  $region30: #{network_forward.1} parent=0 // pred_check
    _
  $region31: #{network_forward.1} parent=0 // pred_check_branch
    %31 = sbr.rel (0) target = $region33
  $region32: #{network_forward.1} parent=0 // pred_region
    _
  $region33: #{network_forward.1} parent=0 // pred_fallthru
    _
  // Predicated region
  $region34: #{network_forward.1} parent=0 // pred_check
    _
  $region35: #{network_forward.1} parent=0 // pred_check_branch
    %33 = sbr.rel (0) target = $region37
  $region36: #{network_forward.1} parent=0 // pred_region
    _
  $region37: #{network_forward.1} parent=0 // pred_fallthru
    _
  %v34 = vld [vmem:[%s2] sm:$0xff]
  %v35 = vld [vmem:[%s2 + $0x8] sm:$0xff]
  %v36 = vld [vmem:[%s2 + $0x10] sm:$0xff]
  %v37 = vld [vmem:[%s2 + $0x18] sm:$0xff]
  %v38 = vld [vmem:[%s2 + $0x20] sm:$0xff]
  %v39 = vld [vmem:[%s2 + $0x28] sm:$0xff]
  %v40 = vld [vmem:[%s2 + $0x30] sm:$0xff]
  %v41 = vld [vmem:[%s2 + $0x38] sm:$0xff]
  %v42 = vld [vmem:[%s2 + $0x40] sm:$0xff]
  %v43 = vld [vmem:[%s2 + $0x48] sm:$0xff]
  %v44 = vld [vmem:[%s2 + $0x50] sm:$0xff]
  %v45 = vld [vmem:[%s2 + $0x58] sm:$0xff]
  %v46 = vld [vmem:[%s2 + $0x60] sm:$0xff]
  %v47 = vld [vmem:[%s2 + $0x68] sm:$0xff]
  %v48 = vld [vmem:[%s2 + $0x70] sm:$0xff]
  %v49 = vld [vmem:[%s2 + $0x78] sm:$0xff]
  %v50 = vld [vmem:[%s2 + $0x80] sm:$0xff]
  %v51 = vld [vmem:[%s2 + $0x88] sm:$0xff]
  %v52 = vld [vmem:[%s2 + $0x90] sm:$0xff]
  %v53 = vld [vmem:[%s2 + $0x98] sm:$0xff]
  %v54 = vld [vmem:[%s2 + $0xa0] sm:$0xff]
  %v55 = vld [vmem:[%s2 + $0xa8] sm:$0xff]
  %v56 = vld [vmem:[%s2 + $0xb0] sm:$0xff]
  %v57 = vld [vmem:[%s2 + $0xb8] sm:$0xff]
  %v58 = vld [vmem:[%s2 + $0xc0] sm:$0xff]
  %v59 = vld [vmem:[%s2 + $0xc8] sm:$0xff]
  %v60 = vld [vmem:[%s2 + $0xd0] sm:$0xff]
  %v61 = vld [vmem:[%s2 + $0xd8] sm:$0xff]
  %v62 = vld [vmem:[%s2 + $0xe0] sm:$0xff]
  %v63 = vld [vmem:[%s2 + $0xe8] sm:$0xff]
  %v64 = vld [vmem:[%s2 + $0xf0] sm:$0xff]
  %v65 = vld [vmem:[%s2 + $0xf8] sm:$0xff]
  %v66 = vld [vmem:[%s2 + $0x100] sm:$0xff]
  %v67 = vld [vmem:[%s2 + $0x108] sm:$0xff]
  %v68 = vld [vmem:[%s2 + $0x110] sm:$0xff]
  %v69 = vld [vmem:[%s2 + $0x118] sm:$0xff]
  %v70 = vld [vmem:[%s2 + $0x120] sm:$0xff]
  %v71 = vld [vmem:[%s2 + $0x128] sm:$0xff]
  %v72 = vld [vmem:[%s2 + $0x130] sm:$0xff]
  %v73 = vld [vmem:[%s2 + $0x138] sm:$0xff]
  %v74 = vld [vmem:[%s2 + $0x140] sm:$0xff]
  %v75 = vld [vmem:[%s2 + $0x148] sm:$0xff]
  %v76 = vld [vmem:[%s2 + $0x150] sm:$0xff]
  %v77 = vld [vmem:[%s2 + $0x158] sm:$0xff]
  %v78 = vld [vmem:[%s2 + $0x160] sm:$0xff]
  %v79 = vld [vmem:[%s2 + $0x168] sm:$0xff]
  %v80 = vld [vmem:[%s2 + $0x170] sm:$0xff]
  %v81 = vld [vmem:[%s2 + $0x178] sm:$0xff]
  %v82 = vld [vmem:[%s4] sm:$0xff]
  %v83 = vld [vmem:[%s4 + $0x8] sm:$0xff]
  %v84 = vld [vmem:[%s4 + $0x10] sm:$0xff]
  %v85 = vld [vmem:[%s4 + $0x18] sm:$0xff]
  %v86 = vld [vmem:[%s4 + $0x20] sm:$0xff]
  %v87 = vld [vmem:[%s4 + $0x28] sm:$0xff]
  %v88 = vld [vmem:[%s4 + $0x30] sm:$0x3]
  %v89 = vld [vmem:[%s0] sm:$0xff]
  %v90 = vld [vmem:[%s0 + $0x8] sm:$0xff]
  %v91 = vld [vmem:[%s0 + $0x10] sm:$0xff]
  %v92 = vld [vmem:[%s1] sm:$0xff]
  %v93 = vld [vmem:[%s1 + $0x8] sm:$0xff]
  %v94 = vld [vmem:[%s1 + $0x10] sm:$0xff]
  %v95 = vld [vmem:[%s3] sm:$0x1]
  %v97 = vlaneseq
  %v98 = vshrl.u32 %v97, 7
  %v99 = vsub.s32 0, %v98
  %v100 = vrot.slane %v95, %v99
  %102 = vmatprep.subr.mxu0 0.0
  %103 = vmatpush1.msra.mxu0 %v49
  %104 = vmatprep.subr.mxu0 0.0
  %105 = vmatpush1.msra.mxu0 %v48
  %106 = vmatprep.subr.mxu0 0.0
  %107 = vmatpush1.msra.mxu0 %v47
  %108 = vmatprep.subr.mxu0 0.0
  %109 = vmatpush1.msra.mxu0 %v46
  %110 = vmatprep.subr.mxu0 0.0
  %111 = vmatpush1.msra.mxu0 %v45
  %112 = vmatprep.subr.mxu0 0.0
  %113 = vmatpush1.msra.mxu0 %v44
  %114 = vmatprep.subr.mxu0 0.0
  %115 = vmatpush1.msra.mxu0 %v43
  %116 = vmatprep.subr.mxu0 0.0
  %117 = vmatpush1.msra.mxu0 %v42
  %118 = vmatprep.subr.mxu0 0.0
  %119 = vmatpush1.msra.mxu0 %v41
  %120 = vmatprep.subr.mxu0 0.0
  %121 = vmatpush1.msra.mxu0 %v40
  %122 = vmatprep.subr.mxu0 0.0
  %123 = vmatpush1.msra.mxu0 %v39
  %124 = vmatprep.subr.mxu0 0.0
  %125 = vmatpush1.msra.mxu0 %v38
  %126 = vmatprep.subr.mxu0 0.0
  %127 = vmatpush1.msra.mxu0 %v37
  %128 = vmatprep.subr.mxu0 0.0
  %129 = vmatpush1.msra.mxu0 %v36
  %130 = vmatprep.subr.mxu0 0.0
  %131 = vmatpush1.msra.mxu0 %v35
  %132 = vmatprep.subr.mxu0 0.0
  %133 = vmatpush1.msra.mxu0 %v34
  %134 = vmatprep.subr.mxu0 0.0
  %135 = vmatpush2.msra.mxu0 %v65
  %136 = vmatprep.subr.mxu0 0.0
  %137 = vmatpush2.msra.mxu0 %v64
  %138 = vmatprep.subr.mxu0 0.0
  %139 = vmatpush2.msra.mxu0 %v63
  %140 = vmatprep.subr.mxu0 0.0
  %141 = vmatpush2.msra.mxu0 %v62
  %142 = vmatprep.subr.mxu0 0.0
  %143 = vmatpush2.msra.mxu0 %v61
  %144 = vmatprep.subr.mxu0 0.0
  %145 = vmatpush2.msra.mxu0 %v60
  %146 = vmatprep.subr.mxu0 0.0
  %147 = vmatpush2.msra.mxu0 %v59
  %148 = vmatprep.subr.mxu0 0.0
  %149 = vmatpush2.msra.mxu0 %v58
  %150 = vmatprep.subr.mxu0 0.0
  %151 = vmatpush2.msra.mxu0 %v57
  %152 = vmatprep.subr.mxu0 0.0
  %153 = vmatpush2.msra.mxu0 %v56
  %154 = vmatprep.subr.mxu0 0.0
  %155 = vmatpush2.msra.mxu0 %v55
  %156 = vmatprep.subr.mxu0 0.0
  %157 = vmatpush2.msra.mxu0 %v54
  %158 = vmatprep.subr.mxu0 0.0
  %159 = vmatpush2.msra.mxu0 %v53
  %160 = vmatprep.subr.mxu0 0.0
  %161 = vmatpush2.msra.mxu0 %v52
  %162 = vmatprep.subr.mxu0 0.0
  %163 = vmatpush2.msra.mxu0 %v51
  %164 = vmatprep.subr.mxu0 0.0
  %165 = vmatpush2.msra.mxu0 %v50
  %166 = vmatprep.mubr.f32.mxu0 %v90
  %167 = vmatmul.mubr.f32.gmra.mxu0 %v89
  %v168 = vpop.f32.mrf.mxu0
  %v169 = vadd.f32 %v100, %v168
  %v170 = vpop.f32.mrf.mxu0
  %171 = vmatprep.mubr.f32.mxu0 %v93
  %172 = vmatmul.mubr.f32.gmra.mxu0 %v92
  %v173 = vpop.f32.mrf.mxu0
  %v174 = vadd.f32 %v100, %v173
  %v175 = vpop.f32.mrf.mxu0
  %176 = vdwg.mxu0
  %177 = vmatprep.subr.mxu0 0.0
  %178 = vmatpush1.msra.mxu0 %v81
  %179 = vmatprep.subr.mxu0 0.0
  %180 = vmatpush1.msra.mxu0 %v80
  %181 = vmatprep.subr.mxu0 0.0
  %182 = vmatpush1.msra.mxu0 %v79
  %183 = vmatprep.subr.mxu0 0.0
  %184 = vmatpush1.msra.mxu0 %v78
  %185 = vmatprep.subr.mxu0 0.0
  %186 = vmatpush1.msra.mxu0 %v77
  %187 = vmatprep.subr.mxu0 0.0
  %188 = vmatpush1.msra.mxu0 %v76
  %189 = vmatprep.subr.mxu0 0.0
  %190 = vmatpush1.msra.mxu0 %v75
  %191 = vmatprep.subr.mxu0 0.0
  %192 = vmatpush1.msra.mxu0 %v74
  %193 = vmatprep.subr.mxu0 0.0
  %194 = vmatpush1.msra.mxu0 %v73
  %195 = vmatprep.subr.mxu0 0.0
  %196 = vmatpush1.msra.mxu0 %v72
  %197 = vmatprep.subr.mxu0 0.0
  %198 = vmatpush1.msra.mxu0 %v71
  %199 = vmatprep.subr.mxu0 0.0
  %200 = vmatpush1.msra.mxu0 %v70
  %201 = vmatprep.subr.mxu0 0.0
  %202 = vmatpush1.msra.mxu0 %v69
  %203 = vmatprep.subr.mxu0 0.0
  %204 = vmatpush1.msra.mxu0 %v68
  %205 = vmatprep.subr.mxu0 0.0
  %206 = vmatpush1.msra.mxu0 %v67
  %207 = vmatprep.subr.mxu0 0.0
  %208 = vmatpush1.msra.mxu0 %v66
  %209 = vmatprep.subr.mxu0 0.0
  %210 = vmatpush2.msra.mxu0 0.0
  %211 = vmatprep.subr.mxu0 0.0
  %212 = vmatpush2.msra.mxu0 0.0
  %213 = vmatprep.subr.mxu0 0.0
  %214 = vmatpush2.msra.mxu0 0.0
  %215 = vmatprep.subr.mxu0 0.0
  %216 = vmatpush2.msra.mxu0 0.0
  %217 = vmatprep.subr.mxu0 0.0
  %218 = vmatpush2.msra.mxu0 0.0
  %219 = vmatprep.subr.mxu0 0.0
  %220 = vmatpush2.msra.mxu0 0.0
  %221 = vmatprep.subr.mxu0 0.0
  %222 = vmatpush2.msra.mxu0 0.0
  %223 = vmatprep.subr.mxu0 0.0
  %224 = vmatpush2.msra.mxu0 0.0
  %225 = vmatprep.subr.mxu0 0.0
  %226 = vmatpush2.msra.mxu0 0.0
  %227 = vmatprep.subr.mxu0 0.0
  %228 = vmatpush2.msra.mxu0 0.0
  %229 = vmatprep.subr.mxu0 0.0
  %230 = vmatpush2.msra.mxu0 0.0
  %231 = vmatprep.subr.mxu0 0.0
  %232 = vmatpush2.msra.mxu0 0.0
  %233 = vmatprep.subr.mxu0 0.0
  %234 = vmatpush2.msra.mxu0 0.0
  %235 = vmatprep.subr.mxu0 0.0
  %236 = vmatpush2.msra.mxu0 0.0
  %237 = vmatprep.subr.mxu0 0.0
  %238 = vmatpush2.msra.mxu0 0.0
  %239 = vmatprep.subr.mxu0 0.0
  %240 = vmatpush2.msra.mxu0 0.0
  %241 = vmatprep.mubr.f32.mxu0 0.0
  %242 = vmatmul.mubr.f32.gmra.mxu0 %v91
  %v243 = vpop.f32.mrf.mxu0
  %v244 = vadd.f32 %v169, %v243
  %v245 = vpop.f32.mrf.mxu0
  %246 = vmatprep.mubr.f32.mxu0 0.0
  %247 = vmatmul.mubr.f32.gmra.mxu0 %v94
  %v248 = vpop.f32.mrf.mxu0
  %v249 = vadd.f32 %v174, %v248
  %v250 = vpop.f32.mrf.mxu0
  %251 = vdwg.mxu0
  %v252 = vmax.f32 %v244, 0.0
  %v253 = vmax.f32 %v249, 0.0
  %v254 = vld [vmem:[%s5] sm:$0x1]
  %v256 = vlaneseq
  %v257 = vshrl.u32 %v256, 7
  %v258 = vsub.s32 0, %v257
  %v259 = vrot.slane %v254, %v258
  %vm261 = vcmask 408576
  %v263 = vsel %vm261, %v252, 0
  %v266 = vsel %vm261, %v253, 0
  %vm268 = vcmask 1041408
  %v270 = vsel %vm268, %v88, 0
  %272 = vmatprep.subr.mxu0 0.0
  %273 = vmatpush1.msra.mxu0 0.0
  %274 = vmatprep.subr.mxu0 0.0
  %275 = vmatpush1.msra.mxu0 0.0
  %276 = vmatprep.subr.mxu0 0.0
  %277 = vmatpush1.msra.mxu0 0.0
  %278 = vmatprep.subr.mxu0 0.0
  %279 = vmatpush1.msra.mxu0 0.0
  %280 = vmatprep.subr.mxu0 0.0
  %281 = vmatpush1.msra.mxu0 0.0
  %282 = vmatprep.subr.mxu0 0.0
  %283 = vmatpush1.msra.mxu0 0.0
  %284 = vmatprep.subr.mxu0 0.0
  %285 = vmatpush1.msra.mxu0 0.0
  %286 = vmatprep.subr.mxu0 0.0
  %287 = vmatpush1.msra.mxu0 0.0
  %288 = vmatprep.subr.mxu0 0.0
  %289 = vmatpush1.msra.mxu0 0.0
  %290 = vmatprep.subr.mxu0 0.0
  %291 = vmatpush1.msra.mxu0 %v270
  %292 = vmatprep.subr.mxu0 0.0
  %293 = vmatpush1.msra.mxu0 %v87
  %294 = vmatprep.subr.mxu0 0.0
  %295 = vmatpush1.msra.mxu0 %v86
  %296 = vmatprep.subr.mxu0 0.0
  %297 = vmatpush1.msra.mxu0 %v85
  %298 = vmatprep.subr.mxu0 0.0
  %299 = vmatpush1.msra.mxu0 %v84
  %300 = vmatprep.subr.mxu0 0.0
  %301 = vmatpush1.msra.mxu0 %v83
  %302 = vmatprep.subr.mxu0 0.0
  %303 = vmatpush1.msra.mxu0 %v82
  %304 = vmatprep.subr.mxu0 0.0
  %305 = vmatpush2.msra.mxu0 0.0
  %306 = vmatprep.subr.mxu0 0.0
  %307 = vmatpush2.msra.mxu0 0.0
  %308 = vmatprep.subr.mxu0 0.0
  %309 = vmatpush2.msra.mxu0 0.0
  %310 = vmatprep.subr.mxu0 0.0
  %311 = vmatpush2.msra.mxu0 0.0
  %312 = vmatprep.subr.mxu0 0.0
  %313 = vmatpush2.msra.mxu0 0.0
  %314 = vmatprep.subr.mxu0 0.0
  %315 = vmatpush2.msra.mxu0 0.0
  %316 = vmatprep.subr.mxu0 0.0
  %317 = vmatpush2.msra.mxu0 0.0
  %318 = vmatprep.subr.mxu0 0.0
  %319 = vmatpush2.msra.mxu0 0.0
  %320 = vmatprep.subr.mxu0 0.0
  %321 = vmatpush2.msra.mxu0 0.0
  %322 = vmatprep.subr.mxu0 0.0
  %323 = vmatpush2.msra.mxu0 0.0
  %324 = vmatprep.subr.mxu0 0.0
  %325 = vmatpush2.msra.mxu0 0.0
  %326 = vmatprep.subr.mxu0 0.0
  %327 = vmatpush2.msra.mxu0 0.0
  %328 = vmatprep.subr.mxu0 0.0
  %329 = vmatpush2.msra.mxu0 0.0
  %330 = vmatprep.subr.mxu0 0.0
  %331 = vmatpush2.msra.mxu0 0.0
  %332 = vmatprep.subr.mxu0 0.0
  %333 = vmatpush2.msra.mxu0 0.0
  %334 = vmatprep.subr.mxu0 0.0
  %335 = vmatpush2.msra.mxu0 0.0
  %336 = vmatprep.mubr.f32.mxu0 0.0
  %337 = vmatmul.mubr.f32.gmra.mxu0 %v263
  %v338 = vpop.f32.mrf.mxu0
  %v339 = vadd.f32 %v259, %v338
  %v340 = vpop.f32.mrf.mxu0
  %341 = vmatprep.mubr.f32.mxu0 0.0
  %342 = vmatmul.mubr.f32.gmra.mxu0 %v266
  %v343 = vpop.f32.mrf.mxu0
  %v344 = vadd.f32 %v259, %v343
  %v345 = vpop.f32.mrf.mxu0
  %346 = vdwg.mxu0
  %v347 = vmax.f32 %v339, 0.0
  %v348 = vmax.f32 %v344, 0.0
  %v349 = vld [vmem:[%s6] sm:$0x1]
  %v351 = vlaneseq
  %v352 = vshrl.u32 %v351, 7
  %v353 = vsub.s32 0, %v352
  %v354 = vrot.slane %v349, %v353
  %v356 = vmul.f32 %v347, %v354
  %v357 = vld [vmem:[%s7] sm:$0x1]
  %v359 = vlaneseq
  %v360 = vshrl.u32 %v359, 7
  %v361 = vsub.s32 0, %v360
  %v362 = vrot.slane %v357, %v361
  %v364 = vmul.f32 %v348, %v362
  %v365 = vadd.f32 %v356, %v364
  %v366 = vsel %vm261, %v365, 0.0
  %367 = vadd.xlane.f32.xlu0 %v366
  %v368 = vpop.xlane.xlu0 %367
  %v369 = vld [vmem:[#allocation2] sm:$0x1]
  %v371 = vlaneseq
  %v372 = vshrl.u32 %v371, 7
  %v373 = vsub.s32 0, %v372
  %v374 = vrot.slane %v369, %v373
  %v376 = vadd.f32 %v368, %v374
  %v377 = vmax.f32 %v376, 0.0
  %vm378 = vcmask 7168
  %379 = vst.msk [vmem:[%s9] sm:$0xff] %vm378, %v377
  // Predicated region
  $region38: #{network_forward.1} parent=0 // pred_check
    _
  $region39: #{network_forward.1} parent=0 // pred_check_branch
    %381 = sbr.rel (0) target = $region41
  $region40: #{network_forward.1} parent=0 // pred_region
    _
  $region41: #{network_forward.1} parent=0 // pred_fallthru
    _
  // Predicated region
  $region42: #{network_forward.1} parent=0 // pred_check
    _
  $region43: #{network_forward.1} parent=0 // pred_check_branch
    %383 = sbr.rel (0) target = $region45
  $region44: #{network_forward.1} parent=0 // pred_region
    _
  $region45: #{network_forward.1} parent=0 // pred_fallthru
    _

</llo_original>
